<compile_context>
chip_gen: v6e
topology: v6e:2x2x1
jax: 0.10.0
libtpu: 0.0.40
codegen_flags: <defaults>
</compile_context>

<pallas_src>
import functools

import jax
import jax.numpy as jnp
from jax.experimental import pallas as pl
from jax.experimental.pallas import tpu as pltpu

_LANE = 128
_SUBLANE = 8


def _round_up(x, m):
    return (x + m - 1) // m * m


def _coupling_kernel(on_ref, off_ref, w_in_ref, b_in_ref, w_mid_ref, b_mid_ref,
                     w_out_ref, b_out_ref, out_ref, *, num_mid, reverse):
    """shift = MLP(off); out = on -/+ shift.  bf16 MXU operands, f32 accumulate."""
    off_bf = off_ref[...].astype(jnp.bfloat16)          # in-kernel cast (free VPU slot)
    h = jnp.dot(off_bf, w_in_ref[...], preferred_element_type=jnp.float32)
    h = jnp.maximum(h + b_in_ref[...], 0.0)              # (TB, mid_p) f32
    for i in range(num_mid):                              # static unroll
        h = jnp.dot(h.astype(jnp.bfloat16), w_mid_ref[i],
                    preferred_element_type=jnp.float32)
        h = jnp.maximum(h + b_mid_ref[i], 0.0)
    shift = jnp.dot(h.astype(jnp.bfloat16), w_out_ref[...],
                    preferred_element_type=jnp.float32)
    shift = shift + b_out_ref[...]                        # (TB, half_p) f32
    if reverse:                                           # static sign
        out_ref[...] = on_ref[...] - shift
    else:
        out_ref[...] = on_ref[...] + shift


def _choose_batch_tile(B):
    """TB multiple of 8 (or full B), capped at 256; >=2 grid steps when B > 8."""
    if B <= _SUBLANE:
        return B
    return min(256, _round_up(pl.cdiv(B, 2), _SUBLANE))


def _coupling_transform_split(on, off, params, *, reverse, single_buffer_weights):
    """Additive coupling on split-layout activations: returns on -/+ MLP(off).

    Stacked coupling layers should call this directly (keep activations split,
    interleave only at model boundaries) to avoid per-layer HBM round trips.
    """
    B, half = on.shape
    num_mid, _, mid_dim = params["w_mid"].shape
    half_p = _round_up(half, _LANE)
    mid_p = _round_up(mid_dim, _LANE)

    def pad2(a, r, c):
        return jnp.pad(a, ((0, r - a.shape[0]), (0, c - a.shape[1])))

    def pad3(a, r, c):
        return jnp.pad(a, ((0, 0), (0, r - a.shape[1]), (0, c - a.shape[2])))

    # Lane-dense (multiple-of-128 last dim) activations / weights; padded
    # rows/cols are exact zeros so the valid outputs are unchanged.
    on_p = pad2(on, B, half_p)
    off_p = pad2(off, B, half_p)
    w_in = pad2(params["w_in"], half_p, mid_p).astype(jnp.bfloat16)
    b_in = pad2(params["b_in"], 1, mid_p)
    w_mid = pad3(params["w_mid"], mid_p, mid_p).astype(jnp.bfloat16)
    b_mid = pad3(params["b_mid"], 1, mid_p)
    w_out = pad2(params["w_out"], mid_p, half_p).astype(jnp.bfloat16)
    b_out = pad2(params["b_out"], 1, half_p)

    TB = _choose_batch_tile(B)
    grid = (pl.cdiv(B, TB),)

    batched = pl.BlockSpec((TB, half_p), lambda i: (i, 0))     # tiled over B

    resident_kwargs = {}
    if single_buffer_weights and hasattr(pl, "Buffered"):
        resident_kwargs = dict(pipeline_mode=pl.Buffered(1))   # fetched once

    def res2(shape):
        return pl.BlockSpec(shape, lambda i: (0, 0), **resident_kwargs)

    def res3(shape):
        return pl.BlockSpec(shape, lambda i: (0, 0, 0), **resident_kwargs)

    # VMEM budget: resident weights/biases (x2 if double-buffered), 2-deep
    # pipelined activation tiles, h scratch; generous headroom, clamped.
    w_bytes = 2 * (half_p * mid_p + num_mid * mid_p * mid_p + mid_p * half_p)
    b_bytes = 4 * ((num_mid + 1) * mid_p + half_p)
    act_bytes = 4 * TB * (3 * half_p)          # on + off + out tiles
    h_bytes = 4 * TB * mid_p * 2
    wfac = 1 if resident_kwargs else 2
    need = wfac * (w_bytes + b_bytes) + 2 * act_bytes + h_bytes
    vmem_limit = int(min(max(2 * need + (4 << 20), 16 << 20), 64 << 20))

    flops = 2 * B * mid_p * (2 * half_p + num_mid * mid_p)
    bytes_accessed = (on_p.size * 4 + off_p.size * 4 + B * half_p * 4
                      + w_bytes + b_bytes)

    kernel = functools.partial(_coupling_kernel, num_mid=num_mid, reverse=reverse)

    out_p = pl.pallas_call(
        kernel,
        out_shape=jax.ShapeDtypeStruct((B, half_p), jnp.float32),
        grid=grid,
        in_specs=[
            batched,                               # on    (f32, TB x half_p)
            batched,                               # off   (f32, TB x half_p)
            res2((half_p, mid_p)),                 # w_in  (bf16)
            res2((1, mid_p)),                      # b_in  (f32)
            res3((num_mid, mid_p, mid_p)),         # w_mid (bf16)
            res3((num_mid, 1, mid_p)),             # b_mid (f32)
            res2((mid_p, half_p)),                 # w_out (bf16)
            res2((1, half_p)),                     # b_out (f32)
        ],
        out_specs=batched,
        compiler_params=pltpu.CompilerParams(
            dimension_semantics=("parallel",),
            vmem_limit_bytes=vmem_limit),
        cost_estimate=pl.CostEstimate(
            flops=flops, transcendentals=0, bytes_accessed=bytes_accessed),
    )(on_p, off_p, w_in, b_in, w_mid, b_mid, w_out, b_out)

    return out_p[:, :half]


@functools.partial(jax.jit,
                   static_argnames=("mask_config", "reverse", "single_buffer_weights"))
def _coupling_forward_impl(x, params, *, mask_config, reverse, single_buffer_weights):
    B, D1, D2 = x.shape
    half = D1 * D2 // 2

    xr = x.reshape(B, half, 2)
    if mask_config:
        on, off = xr[:, :, 0], xr[:, :, 1]
    else:
        off, on = xr[:, :, 0], xr[:, :, 1]

    on_new = _coupling_transform_split(
        on, off, params, reverse=reverse,
        single_buffer_weights=single_buffer_weights)

    if mask_config:
        out = jnp.stack((on_new, off), axis=2)
    else:
        out = jnp.stack((off, on_new), axis=2)
    return out.reshape(B, D1, D2)


_SINGLE_BUFFER_WEIGHTS = True   # disabled at runtime if this build rejects Buffered(1)


def coupling_forward(x, params, *, mask_config, reverse=False):
    """Pallas-backed forward identical to Coupling.forward semantics."""
    global _SINGLE_BUFFER_WEIGHTS
    if _SINGLE_BUFFER_WEIGHTS:
        try:
            return _coupling_forward_impl(
                x, params, mask_config=mask_config, reverse=reverse,
                single_buffer_weights=True)
        except Exception:
            # pipeline_mode=pl.Buffered(1) not supported here; fall back to the
            # default (double-buffered) resident-weight specs.
            _SINGLE_BUFFER_WEIGHTS = False
    return _coupling_forward_impl(
        x, params, mask_config=mask_config, reverse=reverse,
        single_buffer_weights=False)


def init_coupling_params(key, in_out_dim, mid_dim, hidden):
    """Deterministic synthetic parameters matching nn.Linear shapes.

    Weights are stored (in_features, out_features) so y = x @ W + b (transpose
    of torch.nn.Linear storage, same math).
    """
    assert hidden >= 2, "this synthetic setup assumes at least one mid layer"
    half = in_out_dim // 2
    num_mid = hidden - 1
    ks = jax.random.split(key, 6)

    def unif(k, shape, fan_in):
        bound = 1.0 / jnp.sqrt(jnp.float32(fan_in))
        return jax.random.uniform(k, shape, jnp.float32, -bound, bound)

    return dict(
        w_in=unif(ks[0], (half, mid_dim), half),
        b_in=unif(ks[1], (1, mid_dim), half),
        w_mid=unif(ks[2], (num_mid, mid_dim, mid_dim), mid_dim),
        b_mid=unif(ks[3], (num_mid, 1, mid_dim), mid_dim),
        w_out=unif(ks[4], (mid_dim, half), mid_dim),
        b_out=unif(ks[5], (1, half), mid_dim),
    )


def coupling_forward_ref(x, params, mask_config, reverse=False,
                         matmul_dtype=jnp.float32):
    """Pure-JAX reference mirroring the PyTorch module (for verification)."""
    B, D1, D2 = x.shape
    half = D1 * D2 // 2
    xr = x.reshape(B, half, 2)
    if mask_config:
        on, off = xr[:, :, 0], xr[:, :, 1]
    else:
        off, on = xr[:, :, 0], xr[:, :, 1]
    cast = lambda a: a.astype(matmul_dtype)
    h = jnp.dot(cast(off), cast(params["w_in"]),
                preferred_element_type=jnp.float32) + params["b_in"]
    h = jnp.maximum(h, 0.0)
    for i in range(params["w_mid"].shape[0]):
        h = jnp.dot(cast(h), cast(params["w_mid"][i]),
                    preferred_element_type=jnp.float32) + params["b_mid"][i]
        h = jnp.maximum(h, 0.0)
    shift = jnp.dot(cast(h), cast(params["w_out"]),
                    preferred_element_type=jnp.float32) + params["b_out"]
    on = on - shift if reverse else on + shift
    if mask_config:
        out = jnp.stack((on, off), axis=2)
    else:
        out = jnp.stack((off, on), axis=2)
    return out.reshape(B, D1, D2)


if __name__ == "__main__":
    mid_dim, hidden = 32, 3        # one in-block, 2 mid layers, one out-block
    base_key = jax.random.PRNGKey(0)

    def check(B, D1, D2, mask_config, reverse):
        in_out_dim = D1 * D2
        k = jax.random.fold_in(base_key, 1000 * B + 10 * mask_config + int(reverse))
        kx, kp = jax.random.split(k)
        x = jax.random.normal(kx, (B, D1, D2), jnp.float32)
        params = init_coupling_params(kp, in_out_dim, mid_dim, hidden)

        out = jax.block_until_ready(
            coupling_forward(x, params, mask_config=mask_config, reverse=reverse))
        assert out.shape == (B, D1, D2)
        assert out.dtype == jnp.float32

        # Tight check vs a JAX reference using the same bf16-operand matmuls.
        ref_bf = coupling_forward_ref(x, params, mask_config, reverse,
                                      matmul_dtype=jnp.bfloat16)
        assert jnp.allclose(out, ref_bf, atol=2e-3, rtol=2e-3), "mismatch vs bf16 ref"

        # Loose semantic sanity check vs the full-f32 reference.
        ref_f32 = coupling_forward_ref(x, params, mask_config, reverse,
                                       matmul_dtype=jnp.float32)
        assert jnp.allclose(out, ref_f32, atol=1e-1, rtol=1e-1), "mismatch vs f32 ref"

    # Small shapes implied by the forward (in_out_dim = D1*D2 = 64, half = 32).
    check(2, 4, 16, mask_config=1, reverse=False)   # sampling mode, odd units
    check(2, 4, 16, mask_config=1, reverse=True)    # inference / inverse mode
    check(2, 4, 16, mask_config=0, reverse=False)   # transform even units
    # Larger batch: multi-step "parallel" batch grid + masked partial last tile.
    check(100, 4, 16, mask_config=1, reverse=False)

    print("KERNEL_OK")
</pallas_src>

<mosaic_0001>
module attributes {stable_mosaic.version = 11 : i64} {
  func.func @_coupling_kernel(%arg0: i32, %arg1: memref<2x128xf32, #tpu.memory_space<vmem>>, %arg2: memref<2x128xf32, #tpu.memory_space<vmem>>, %arg3: memref<128x128xbf16, #tpu.memory_space<vmem>>, %arg4: memref<1x128xf32, #tpu.memory_space<vmem>>, %arg5: memref<2x128x128xbf16, #tpu.memory_space<vmem>>, %arg6: memref<2x1x128xf32, #tpu.memory_space<vmem>>, %arg7: memref<128x128xbf16, #tpu.memory_space<vmem>>, %arg8: memref<1x128xf32, #tpu.memory_space<vmem>>, %arg9: memref<2x128xf32, #tpu.memory_space<vmem>>) attributes {dimension_semantics = [#tpu.dimension_semantics<parallel>], iteration_bounds = array<i64: 1>, scalar_prefetch = 0 : i64, scratch_operands = 0 : i64, tpu.core_type = #tpu.core_type<tc>, window_params = [{transform_indices = @transform_0, window_bounds = array<i64: 2, 128>}, {transform_indices = @transform_1, window_bounds = array<i64: 2, 128>}, {pipeline_mode = #tpu.pipeline_mode<synchronous>, transform_indices = @transform_2, window_bounds = array<i64: 128, 128>}, {pipeline_mode = #tpu.pipeline_mode<synchronous>, transform_indices = @transform_3, window_bounds = array<i64: 1, 128>}, {pipeline_mode = #tpu.pipeline_mode<synchronous>, transform_indices = @transform_4, window_bounds = array<i64: 2, 128, 128>}, {pipeline_mode = #tpu.pipeline_mode<synchronous>, transform_indices = @transform_5, window_bounds = array<i64: 2, 1, 128>}, {pipeline_mode = #tpu.pipeline_mode<synchronous>, transform_indices = @transform_6, window_bounds = array<i64: 128, 128>}, {pipeline_mode = #tpu.pipeline_mode<synchronous>, transform_indices = @transform_7, window_bounds = array<i64: 1, 128>}, {transform_indices = @transform_8, window_bounds = array<i64: 2, 128>}]} {
    %c0 = arith.constant 0 : index
    %c0_0 = arith.constant 0 : index
    %0 = vector.load %arg2[%c0, %c0_0] : memref<2x128xf32, #tpu.memory_space<vmem>>, vector<2x128xf32>
    %1 = arith.truncf %0 : vector<2x128xf32> to vector<2x128xbf16>
    %c0_1 = arith.constant 0 : index
    %c0_2 = arith.constant 0 : index
    %2 = vector.load %arg3[%c0_1, %c0_2] : memref<128x128xbf16, #tpu.memory_space<vmem>>, vector<128x128xbf16>
    %cst = arith.constant dense<0.000000e+00> : vector<2x128xf32>
    %3 = tpu.matmul %1, %2, %cst {dimension_numbers = #tpu.dot_dimension_numbers<[1], [0], [0], [1], [0, 0, 1, 1], [], []>} : vector<2x128xbf16>, vector<128x128xbf16>, vector<2x128xf32> -> vector<2x128xf32>
    %c0_3 = arith.constant 0 : index
    %c0_4 = arith.constant 0 : index
    %4 = vector.load %arg4[%c0_3, %c0_4] : memref<1x128xf32, #tpu.memory_space<vmem>>, vector<1x128xf32>
    %5 = vector.broadcast %4 : vector<1x128xf32> to vector<2x128xf32>
    %6 = arith.addf %3, %5 : vector<2x128xf32>
    %cst_5 = arith.constant 0.000000e+00 : f32
    %7 = vector.broadcast %cst_5 : f32 to vector<2x128xf32>
    %8 = arith.maximumf %6, %7 : vector<2x128xf32>
    %9 = arith.truncf %8 : vector<2x128xf32> to vector<2x128xbf16>
    %c0_6 = arith.constant 0 : index
    %c0_7 = arith.constant 0 : index
    %c0_8 = arith.constant 0 : index
    %10 = vector.load %arg5[%c0_6, %c0_7, %c0_8] : memref<2x128x128xbf16, #tpu.memory_space<vmem>>, vector<1x128x128xbf16>
    %11 = vector.shape_cast %10 : vector<1x128x128xbf16> to vector<128x128xbf16>
    %cst_9 = arith.constant dense<0.000000e+00> : vector<2x128xf32>
    %12 = tpu.matmul %9, %11, %cst_9 {dimension_numbers = #tpu.dot_dimension_numbers<[1], [0], [0], [1], [0, 0, 1, 1], [], []>} : vector<2x128xbf16>, vector<128x128xbf16>, vector<2x128xf32> -> vector<2x128xf32>
    %c0_10 = arith.constant 0 : index
    %c0_11 = arith.constant 0 : index
    %c0_12 = arith.constant 0 : index
    %13 = vector.load %arg6[%c0_10, %c0_11, %c0_12] : memref<2x1x128xf32, #tpu.memory_space<vmem>>, vector<1x1x128xf32>
    %14 = vector.shape_cast %13 : vector<1x1x128xf32> to vector<1x128xf32>
    %15 = vector.broadcast %14 : vector<1x128xf32> to vector<2x128xf32>
    %16 = arith.addf %12, %15 : vector<2x128xf32>
    %cst_13 = arith.constant 0.000000e+00 : f32
    %17 = vector.broadcast %cst_13 : f32 to vector<2x128xf32>
    %18 = arith.maximumf %16, %17 : vector<2x128xf32>
    %19 = arith.truncf %18 : vector<2x128xf32> to vector<2x128xbf16>
    %c1 = arith.constant 1 : index
    %c0_14 = arith.constant 0 : index
    %c0_15 = arith.constant 0 : index
    %20 = vector.load %arg5[%c1, %c0_14, %c0_15] : memref<2x128x128xbf16, #tpu.memory_space<vmem>>, vector<1x128x128xbf16>
    %21 = vector.shape_cast %20 : vector<1x128x128xbf16> to vector<128x128xbf16>
    %cst_16 = arith.constant dense<0.000000e+00> : vector<2x128xf32>
    %22 = tpu.matmul %19, %21, %cst_16 {dimension_numbers = #tpu.dot_dimension_numbers<[1], [0], [0], [1], [0, 0, 1, 1], [], []>} : vector<2x128xbf16>, vector<128x128xbf16>, vector<2x128xf32> -> vector<2x128xf32>
    %c1_17 = arith.constant 1 : index
    %c0_18 = arith.constant 0 : index
    %c0_19 = arith.constant 0 : index
    %23 = vector.load %arg6[%c1_17, %c0_18, %c0_19] : memref<2x1x128xf32, #tpu.memory_space<vmem>>, vector<1x1x128xf32>
    %24 = vector.shape_cast %23 : vector<1x1x128xf32> to vector<1x128xf32>
    %25 = vector.broadcast %24 : vector<1x128xf32> to vector<2x128xf32>
    %26 = arith.addf %22, %25 : vector<2x128xf32>
    %cst_20 = arith.constant 0.000000e+00 : f32
    %27 = vector.broadcast %cst_20 : f32 to vector<2x128xf32>
    %28 = arith.maximumf %26, %27 : vector<2x128xf32>
    %29 = arith.truncf %28 : vector<2x128xf32> to vector<2x128xbf16>
    %c0_21 = arith.constant 0 : index
    %c0_22 = arith.constant 0 : index
    %30 = vector.load %arg7[%c0_21, %c0_22] : memref<128x128xbf16, #tpu.memory_space<vmem>>, vector<128x128xbf16>
    %cst_23 = arith.constant dense<0.000000e+00> : vector<2x128xf32>
    %31 = tpu.matmul %29, %30, %cst_23 {dimension_numbers = #tpu.dot_dimension_numbers<[1], [0], [0], [1], [0, 0, 1, 1], [], []>} : vector<2x128xbf16>, vector<128x128xbf16>, vector<2x128xf32> -> vector<2x128xf32>
    %c0_24 = arith.constant 0 : index
    %c0_25 = arith.constant 0 : index
    %32 = vector.load %arg8[%c0_24, %c0_25] : memref<1x128xf32, #tpu.memory_space<vmem>>, vector<1x128xf32>
    %33 = vector.broadcast %32 : vector<1x128xf32> to vector<2x128xf32>
    %34 = arith.addf %31, %33 : vector<2x128xf32>
    %c0_26 = arith.constant 0 : index
    %c0_27 = arith.constant 0 : index
    %35 = vector.load %arg1[%c0_26, %c0_27] : memref<2x128xf32, #tpu.memory_space<vmem>>, vector<2x128xf32>
    %36 = arith.addf %35, %34 : vector<2x128xf32>
    %c0_28 = arith.constant 0 : index
    %c0_29 = arith.constant 0 : index
    %37 = vector.load %arg9[%c0_28, %c0_29] : memref<2x128xf32, #tpu.memory_space<vmem>>, vector<2x128xf32>
    tpu.vector_store %arg9[%c0_28, %c0_29], %36 {strides = array<i32>} : memref<2x128xf32, #tpu.memory_space<vmem>>, vector<2x128xf32>,
    return
  }
  func.func @transform_0(%arg0: i32) -> (i32, i32) {
    %c0_i32 = arith.constant 0 : i32
    %c0_i32_0 = arith.constant 0 : i32
    return %arg0, %c0_i32 : i32, i32
  }
  func.func @transform_1(%arg0: i32) -> (i32, i32) {
    %c0_i32 = arith.constant 0 : i32
    %c0_i32_0 = arith.constant 0 : i32
    return %arg0, %c0_i32 : i32, i32
  }
  func.func @transform_2(%arg0: i32) -> (i32, i32) {
    %c0_i32 = arith.constant 0 : i32
    %c0_i32_0 = arith.constant 0 : i32
    %c0_i32_1 = arith.constant 0 : i32
    return %c0_i32, %c0_i32_0 : i32, i32
  }
  func.func @transform_3(%arg0: i32) -> (i32, i32) {
    %c0_i32 = arith.constant 0 : i32
    %c0_i32_0 = arith.constant 0 : i32
    %c0_i32_1 = arith.constant 0 : i32
    return %c0_i32, %c0_i32_0 : i32, i32
  }
  func.func @transform_4(%arg0: i32) -> (i32, i32, i32) {
    %c0_i32 = arith.constant 0 : i32
    %c0_i32_0 = arith.constant 0 : i32
    %c0_i32_1 = arith.constant 0 : i32
    %c0_i32_2 = arith.constant 0 : i32
    return %c0_i32, %c0_i32_0, %c0_i32_1 : i32, i32, i32
  }
  func.func @transform_5(%arg0: i32) -> (i32, i32, i32) {
    %c0_i32 = arith.constant 0 : i32
    %c0_i32_0 = arith.constant 0 : i32
    %c0_i32_1 = arith.constant 0 : i32
    %c0_i32_2 = arith.constant 0 : i32
    return %c0_i32, %c0_i32_0, %c0_i32_1 : i32, i32, i32
  }
  func.func @transform_6(%arg0: i32) -> (i32, i32) {
    %c0_i32 = arith.constant 0 : i32
    %c0_i32_0 = arith.constant 0 : i32
    %c0_i32_1 = arith.constant 0 : i32
    return %c0_i32, %c0_i32_0 : i32, i32
  }
  func.func @transform_7(%arg0: i32) -> (i32, i32) {
    %c0_i32 = arith.constant 0 : i32
    %c0_i32_0 = arith.constant 0 : i32
    %c0_i32_1 = arith.constant 0 : i32
    return %c0_i32, %c0_i32_0 : i32, i32
  }
  func.func @transform_8(%arg0: i32) -> (i32, i32) {
    %c0_i32 = arith.constant 0 : i32
    %c0_i32_0 = arith.constant 0 : i32
    return %arg0, %c0_i32 : i32, i32
  }
}

module attributes {stable_mosaic.version = 11 : i64} {
  func.func @_coupling_kernel(%arg0: i32, %arg1: memref<2x128xf32, #tpu.memory_space<vmem>>, %arg2: memref<2x128xf32, #tpu.memory_space<vmem>>, %arg3: memref<128x128xbf16, #tpu.memory_space<vmem>>, %arg4: memref<1x128xf32, #tpu.memory_space<vmem>>, %arg5: memref<2x128x128xbf16, #tpu.memory_space<vmem>>, %arg6: memref<2x1x128xf32, #tpu.memory_space<vmem>>, %arg7: memref<128x128xbf16, #tpu.memory_space<vmem>>, %arg8: memref<1x128xf32, #tpu.memory_space<vmem>>, %arg9: memref<2x128xf32, #tpu.memory_space<vmem>>) attributes {dimension_semantics = [#tpu.dimension_semantics<parallel>], iteration_bounds = array<i64: 1>, scalar_prefetch = 0 : i64, scratch_operands = 0 : i64, tpu.core_type = #tpu.core_type<tc>, window_params = [{transform_indices = @transform_0, window_bounds = array<i64: 2, 128>}, {transform_indices = @transform_1, window_bounds = array<i64: 2, 128>}, {pipeline_mode = #tpu.pipeline_mode<synchronous>, transform_indices = @transform_2, window_bounds = array<i64: 128, 128>}, {pipeline_mode = #tpu.pipeline_mode<synchronous>, transform_indices = @transform_3, window_bounds = array<i64: 1, 128>}, {pipeline_mode = #tpu.pipeline_mode<synchronous>, transform_indices = @transform_4, window_bounds = array<i64: 2, 128, 128>}, {pipeline_mode = #tpu.pipeline_mode<synchronous>, transform_indices = @transform_5, window_bounds = array<i64: 2, 1, 128>}, {pipeline_mode = #tpu.pipeline_mode<synchronous>, transform_indices = @transform_6, window_bounds = array<i64: 128, 128>}, {pipeline_mode = #tpu.pipeline_mode<synchronous>, transform_indices = @transform_7, window_bounds = array<i64: 1, 128>}, {transform_indices = @transform_8, window_bounds = array<i64: 2, 128>}]} {
    %c0 = arith.constant 0 : index
    %c0_0 = arith.constant 0 : index
    %0 = vector.load %arg2[%c0, %c0_0] : memref<2x128xf32, #tpu.memory_space<vmem>>, vector<2x128xf32>
    %1 = arith.truncf %0 : vector<2x128xf32> to vector<2x128xbf16>
    %c0_1 = arith.constant 0 : index
    %c0_2 = arith.constant 0 : index
    %2 = vector.load %arg3[%c0_1, %c0_2] : memref<128x128xbf16, #tpu.memory_space<vmem>>, vector<128x128xbf16>
    %cst = arith.constant dense<0.000000e+00> : vector<2x128xf32>
    %3 = tpu.matmul %1, %2, %cst {dimension_numbers = #tpu.dot_dimension_numbers<[1], [0], [0], [1], [0, 0, 1, 1], [], []>} : vector<2x128xbf16>, vector<128x128xbf16>, vector<2x128xf32> -> vector<2x128xf32>
    %c0_3 = arith.constant 0 : index
    %c0_4 = arith.constant 0 : index
    %4 = vector.load %arg4[%c0_3, %c0_4] : memref<1x128xf32, #tpu.memory_space<vmem>>, vector<1x128xf32>
    %5 = vector.broadcast %4 : vector<1x128xf32> to vector<2x128xf32>
    %6 = arith.addf %3, %5 : vector<2x128xf32>
    %cst_5 = arith.constant 0.000000e+00 : f32
    %7 = vector.broadcast %cst_5 : f32 to vector<2x128xf32>
    %8 = arith.maximumf %6, %7 : vector<2x128xf32>
    %9 = arith.truncf %8 : vector<2x128xf32> to vector<2x128xbf16>
    %c0_6 = arith.constant 0 : index
    %c0_7 = arith.constant 0 : index
    %c0_8 = arith.constant 0 : index
    %10 = vector.load %arg5[%c0_6, %c0_7, %c0_8] : memref<2x128x128xbf16, #tpu.memory_space<vmem>>, vector<1x128x128xbf16>
    %11 = vector.shape_cast %10 : vector<1x128x128xbf16> to vector<128x128xbf16>
    %cst_9 = arith.constant dense<0.000000e+00> : vector<2x128xf32>
    %12 = tpu.matmul %9, %11, %cst_9 {dimension_numbers = #tpu.dot_dimension_numbers<[1], [0], [0], [1], [0, 0, 1, 1], [], []>} : vector<2x128xbf16>, vector<128x128xbf16>, vector<2x128xf32> -> vector<2x128xf32>
    %c0_10 = arith.constant 0 : index
    %c0_11 = arith.constant 0 : index
    %c0_12 = arith.constant 0 : index
    %13 = vector.load %arg6[%c0_10, %c0_11, %c0_12] : memref<2x1x128xf32, #tpu.memory_space<vmem>>, vector<1x1x128xf32>
    %14 = vector.shape_cast %13 : vector<1x1x128xf32> to vector<1x128xf32>
    %15 = vector.broadcast %14 : vector<1x128xf32> to vector<2x128xf32>
    %16 = arith.addf %12, %15 : vector<2x128xf32>
    %cst_13 = arith.constant 0.000000e+00 : f32
    %17 = vector.broadcast %cst_13 : f32 to vector<2x128xf32>
    %18 = arith.maximumf %16, %17 : vector<2x128xf32>
    %19 = arith.truncf %18 : vector<2x128xf32> to vector<2x128xbf16>
    %c1 = arith.constant 1 : index
    %c0_14 = arith.constant 0 : index
    %c0_15 = arith.constant 0 : index
    %20 = vector.load %arg5[%c1, %c0_14, %c0_15] : memref<2x128x128xbf16, #tpu.memory_space<vmem>>, vector<1x128x128xbf16>
    %21 = vector.shape_cast %20 : vector<1x128x128xbf16> to vector<128x128xbf16>
    %cst_16 = arith.constant dense<0.000000e+00> : vector<2x128xf32>
    %22 = tpu.matmul %19, %21, %cst_16 {dimension_numbers = #tpu.dot_dimension_numbers<[1], [0], [0], [1], [0, 0, 1, 1], [], []>} : vector<2x128xbf16>, vector<128x128xbf16>, vector<2x128xf32> -> vector<2x128xf32>
    %c1_17 = arith.constant 1 : index
    %c0_18 = arith.constant 0 : index
    %c0_19 = arith.constant 0 : index
    %23 = vector.load %arg6[%c1_17, %c0_18, %c0_19] : memref<2x1x128xf32, #tpu.memory_space<vmem>>, vector<1x1x128xf32>
    %24 = vector.shape_cast %23 : vector<1x1x128xf32> to vector<1x128xf32>
    %25 = vector.broadcast %24 : vector<1x128xf32> to vector<2x128xf32>
    %26 = arith.addf %22, %25 : vector<2x128xf32>
    %cst_20 = arith.constant 0.000000e+00 : f32
    %27 = vector.broadcast %cst_20 : f32 to vector<2x128xf32>
    %28 = arith.maximumf %26, %27 : vector<2x128xf32>
    %29 = arith.truncf %28 : vector<2x128xf32> to vector<2x128xbf16>
    %c0_21 = arith.constant 0 : index
    %c0_22 = arith.constant 0 : index
    %30 = vector.load %arg7[%c0_21, %c0_22] : memref<128x128xbf16, #tpu.memory_space<vmem>>, vector<128x128xbf16>
    %cst_23 = arith.constant dense<0.000000e+00> : vector<2x128xf32>
    %31 = tpu.matmul %29, %30, %cst_23 {dimension_numbers = #tpu.dot_dimension_numbers<[1], [0], [0], [1], [0, 0, 1, 1], [], []>} : vector<2x128xbf16>, vector<128x128xbf16>, vector<2x128xf32> -> vector<2x128xf32>
    %c0_24 = arith.constant 0 : index
    %c0_25 = arith.constant 0 : index
    %32 = vector.load %arg8[%c0_24, %c0_25] : memref<1x128xf32, #tpu.memory_space<vmem>>, vector<1x128xf32>
    %33 = vector.broadcast %32 : vector<1x128xf32> to vector<2x128xf32>
    %34 = arith.addf %31, %33 : vector<2x128xf32>
    %c0_26 = arith.constant 0 : index
    %c0_27 = arith.constant 0 : index
    %35 = vector.load %arg1[%c0_26, %c0_27] : memref<2x128xf32, #tpu.memory_space<vmem>>, vector<2x128xf32>
    %36 = arith.addf %35, %34 : vector<2x128xf32>
    %c0_28 = arith.constant 0 : index
    %c0_29 = arith.constant 0 : index
    %37 = vector.load %arg9[%c0_28, %c0_29] : memref<2x128xf32, #tpu.memory_space<vmem>>, vector<2x128xf32>
    tpu.vector_store %arg9[%c0_28, %c0_29], %36 {strides = array<i32>} : memref<2x128xf32, #tpu.memory_space<vmem>>, vector<2x128xf32>,
    return
  }
  func.func @transform_0(%arg0: i32) -> (i32, i32) {
    %c0_i32 = arith.constant 0 : i32
    %c0_i32_0 = arith.constant 0 : i32
    return %arg0, %c0_i32 : i32, i32
  }
  func.func @transform_1(%arg0: i32) -> (i32, i32) {
    %c0_i32 = arith.constant 0 : i32
    %c0_i32_0 = arith.constant 0 : i32
    return %arg0, %c0_i32 : i32, i32
  }
  func.func @transform_2(%arg0: i32) -> (i32, i32) {
    %c0_i32 = arith.constant 0 : i32
    %c0_i32_0 = arith.constant 0 : i32
    %c0_i32_1 = arith.constant 0 : i32
    return %c0_i32, %c0_i32_0 : i32, i32
  }
  func.func @transform_3(%arg0: i32) -> (i32, i32) {
    %c0_i32 = arith.constant 0 : i32
    %c0_i32_0 = arith.constant 0 : i32
    %c0_i32_1 = arith.constant 0 : i32
    return %c0_i32, %c0_i32_0 : i32, i32
  }
  func.func @transform_4(%arg0: i32) -> (i32, i32, i32) {
    %c0_i32 = arith.constant 0 : i32
    %c0_i32_0 = arith.constant 0 : i32
    %c0_i32_1 = arith.constant 0 : i32
    %c0_i32_2 = arith.constant 0 : i32
    return %c0_i32, %c0_i32_0, %c0_i32_1 : i32, i32, i32
  }
  func.func @transform_5(%arg0: i32) -> (i32, i32, i32) {
    %c0_i32 = arith.constant 0 : i32
    %c0_i32_0 = arith.constant 0 : i32
    %c0_i32_1 = arith.constant 0 : i32
    %c0_i32_2 = arith.constant 0 : i32
    return %c0_i32, %c0_i32_0, %c0_i32_1 : i32, i32, i32
  }
  func.func @transform_6(%arg0: i32) -> (i32, i32) {
    %c0_i32 = arith.constant 0 : i32
    %c0_i32_0 = arith.constant 0 : i32
    %c0_i32_1 = arith.constant 0 : i32
    return %c0_i32, %c0_i32_0 : i32, i32
  }
  func.func @transform_7(%arg0: i32) -> (i32, i32) {
    %c0_i32 = arith.constant 0 : i32
    %c0_i32_0 = arith.constant 0 : i32
    %c0_i32_1 = arith.constant 0 : i32
    return %c0_i32, %c0_i32_0 : i32, i32
  }
  func.func @transform_8(%arg0: i32) -> (i32, i32) {
    %c0_i32 = arith.constant 0 : i32
    %c0_i32_0 = arith.constant 0 : i32
    return %arg0, %c0_i32 : i32, i32
  }
}

</mosaic_0001>

<llo_original>
// kernel: _coupling_forward_impl.1
$region0: #{_coupling_forward_impl.1}
  #allocation0 [shape = 'u32[]', space=smem, size = 0x4, offset = 0x4, fixed_abs, tag = 'smem constant byte address 0x4 - core index']
  #allocation1 [shape = 'u32[144,128]{1,0:T(1,128)}', space=vmem, size = 0x12000, scoped, tag = 'internal scratch']
  %s0 = inlined_call_operand.vmem [shape: f32[2,128], index: 0, kind: input, shape index: {}]
  %s1 = inlined_call_operand.vmem [shape: f32[2,128], index: 1, kind: input, shape index: {}]
  %s2 = inlined_call_operand.vmem [shape: bf16[128,128], index: 2, kind: input, shape index: {}]
  %s3 = inlined_call_operand.vmem [shape: f32[1,128], index: 3, kind: input, shape index: {}]
  %s4 = inlined_call_operand.vmem [shape: bf16[2,128,128], index: 4, kind: input, shape index: {}]
  %s5 = inlined_call_operand.vmem [shape: f32[2,1,128], index: 5, kind: input, shape index: {}]
  %s6 = inlined_call_operand.vmem [shape: bf16[128,128], index: 6, kind: input, shape index: {}]
  %s7 = inlined_call_operand.vmem [shape: f32[1,128], index: 7, kind: input, shape index: {}]
  %s8 = inlined_call_operand.vmem [shape: f32[2,128], index: 8, kind: output, shape index: {}]
  %s9 = sld [smem:[#allocation0]]
  $region42: #{_coupling_forward_impl.1} parent=0
    _
  %s11 = ssub.s32 1, %s9
  %s12 = scalar_select 0, %s11, %s9
  // Predicated region
  $region2: #{_coupling_forward_impl.1} parent=0 // pred_check
    _
  $region3: #{_coupling_forward_impl.1} parent=0 // pred_check_branch
    %14 = sbr.rel (0) target = $region5
  $region4: #{_coupling_forward_impl.1} parent=0 // pred_region
    _
  $region5: #{_coupling_forward_impl.1} parent=0 // pred_fallthru
    _
  // Predicated region
  $region6: #{_coupling_forward_impl.1} parent=0 // pred_check
    _
  $region7: #{_coupling_forward_impl.1} parent=0 // pred_check_branch
    %16 = sbr.rel (0) target = $region9
  $region8: #{_coupling_forward_impl.1} parent=0 // pred_region
    _
  $region9: #{_coupling_forward_impl.1} parent=0 // pred_fallthru
    _
  // Predicated region
  $region10: #{_coupling_forward_impl.1} parent=0 // pred_check
    _
  $region11: #{_coupling_forward_impl.1} parent=0 // pred_check_branch
    %18 = sbr.rel (0) target = $region13
  $region12: #{_coupling_forward_impl.1} parent=0 // pred_region
    _
  $region13: #{_coupling_forward_impl.1} parent=0 // pred_fallthru
    _
  // Predicated region
  $region14: #{_coupling_forward_impl.1} parent=0 // pred_check
    _
  $region15: #{_coupling_forward_impl.1} parent=0 // pred_check_branch
    %20 = sbr.rel (0) target = $region17
  $region16: #{_coupling_forward_impl.1} parent=0 // pred_region
    _
  $region17: #{_coupling_forward_impl.1} parent=0 // pred_fallthru
    _
  // Predicated region
  $region18: #{_coupling_forward_impl.1} parent=0 // pred_check
    _
  $region19: #{_coupling_forward_impl.1} parent=0 // pred_check_branch
    %22 = sbr.rel (0) target = $region21
  $region20: #{_coupling_forward_impl.1} parent=0 // pred_region
    _
  $region21: #{_coupling_forward_impl.1} parent=0 // pred_fallthru
    _
  // Predicated region
  $region22: #{_coupling_forward_impl.1} parent=0 // pred_check
    _
  $region23: #{_coupling_forward_impl.1} parent=0 // pred_check_branch
    %24 = sbr.rel (0) target = $region25
  $region24: #{_coupling_forward_impl.1} parent=0 // pred_region
    _
  $region25: #{_coupling_forward_impl.1} parent=0 // pred_fallthru
    _
  // Predicated region
  $region26: #{_coupling_forward_impl.1} parent=0 // pred_check
    _
  $region27: #{_coupling_forward_impl.1} parent=0 // pred_check_branch
    %26 = sbr.rel (0) target = $region29
  $region28: #{_coupling_forward_impl.1} parent=0 // pred_region
    _
  $region29: #{_coupling_forward_impl.1} parent=0 // pred_fallthru
    _
  // Predicated region
  $region30: #{_coupling_forward_impl.1} parent=0 // pred_check
    _
  $region31: #{_coupling_forward_impl.1} parent=0 // pred_check_branch
    %28 = sbr.rel (0) target = $region33
  $region32: #{_coupling_forward_impl.1} parent=0 // pred_region
    _
  $region33: #{_coupling_forward_impl.1} parent=0 // pred_fallthru
    _
  %v30 = vld [vmem:[%s1] sm:$0x3]
  %v31 = vpack.c.bf16 %v30, %v30
  %v32 = vld [vmem:[%s2] sm:$0xf]
  %v33 = vld [vmem:[%s2 + $0x4] sm:$0xf]
  %v34 = vld [vmem:[%s2 + $0x8] sm:$0xf]
  %v35 = vld [vmem:[%s2 + $0xc] sm:$0xf]
  %v36 = vld [vmem:[%s2 + $0x10] sm:$0xf]
  %v37 = vld [vmem:[%s2 + $0x14] sm:$0xf]
  %v38 = vld [vmem:[%s2 + $0x18] sm:$0xf]
  %v39 = vld [vmem:[%s2 + $0x1c] sm:$0xf]
  %v40 = vld [vmem:[%s2 + $0x20] sm:$0xf]
  %v41 = vld [vmem:[%s2 + $0x24] sm:$0xf]
  %v42 = vld [vmem:[%s2 + $0x28] sm:$0xf]
  %v43 = vld [vmem:[%s2 + $0x2c] sm:$0xf]
  %v44 = vld [vmem:[%s2 + $0x30] sm:$0xf]
  %v45 = vld [vmem:[%s2 + $0x34] sm:$0xf]
  %v46 = vld [vmem:[%s2 + $0x38] sm:$0xf]
  %v47 = vld [vmem:[%s2 + $0x3c] sm:$0xf]
  %v48 = vld [vmem:[%s3] sm:$0x1]
  %v50 = vlaneseq
  %v51 = vshrl.u32 %v50, 7
  %v52 = vsub.s32 0, %v51
  %v53 = vrot.slane %v48, %v52
  %v71 = vunpack.c.l.b16 %v32
  %v72 = vunpack.c.l.b16 %v33
  %v73 = vunpack.c.l.b16 %v34
  %v74 = vunpack.c.l.b16 %v35
  %v75 = vunpack.c.l.b16 %v36
  %v76 = vunpack.c.l.b16 %v37
  %v77 = vunpack.c.l.b16 %v38
  %v78 = vunpack.c.l.b16 %v39
  %v79 = vunpack.c.l.b16 %v40
  %v80 = vunpack.c.l.b16 %v41
  %v81 = vunpack.c.l.b16 %v42
  %v82 = vunpack.c.l.b16 %v43
  %v83 = vunpack.c.l.b16 %v44
  %v84 = vunpack.c.l.b16 %v45
  %v85 = vunpack.c.l.b16 %v46
  %v86 = vunpack.c.l.b16 %v47
  %v87 = vpack.c.b16 %v72, %v71
  %v88 = vpack.c.b16 %v74, %v73
  %v89 = vpack.c.b16 %v76, %v75
  %v90 = vpack.c.b16 %v78, %v77
  %v91 = vpack.c.b16 %v80, %v79
  %v92 = vpack.c.b16 %v82, %v81
  %v93 = vpack.c.b16 %v84, %v83
  %v94 = vpack.c.b16 %v86, %v85
  %103 = vmatprep.subr.bf16.mxu0 0
  %104 = vmatpush1.bf16.msra.mxu0 %v94
  %105 = vmatprep.subr.bf16.mxu0 0
  %106 = vmatpush1.bf16.msra.mxu0 %v93
  %107 = vmatprep.subr.bf16.mxu0 0
  %108 = vmatpush1.bf16.msra.mxu0 %v92
  %109 = vmatprep.subr.bf16.mxu0 0
  %110 = vmatpush1.bf16.msra.mxu0 %v91
  %111 = vmatprep.subr.bf16.mxu0 0
  %112 = vmatpush1.bf16.msra.mxu0 %v90
  %113 = vmatprep.subr.bf16.mxu0 0
  %114 = vmatpush1.bf16.msra.mxu0 %v89
  %115 = vmatprep.subr.bf16.mxu0 0
  %116 = vmatpush1.bf16.msra.mxu0 %v88
  %117 = vmatprep.subr.bf16.mxu0 0
  %118 = vmatpush1.bf16.msra.mxu0 %v87
  %119 = vmatprep.subr.bf16.mxu0 0
  %120 = vmatpush2.bf16.msra.mxu0 0
  %121 = vmatprep.subr.bf16.mxu0 0
  %122 = vmatpush2.bf16.msra.mxu0 0
  %123 = vmatprep.subr.bf16.mxu0 0
  %124 = vmatpush2.bf16.msra.mxu0 0
  %125 = vmatprep.subr.bf16.mxu0 0
  %126 = vmatpush2.bf16.msra.mxu0 0
  %127 = vmatprep.subr.bf16.mxu0 0
  %128 = vmatpush2.bf16.msra.mxu0 0
  %129 = vmatprep.subr.bf16.mxu0 0
  %130 = vmatpush2.bf16.msra.mxu0 0
  %131 = vmatprep.subr.bf16.mxu0 0
  %132 = vmatpush2.bf16.msra.mxu0 0
  %133 = vmatprep.subr.bf16.mxu0 0
  %134 = vmatpush2.bf16.msra.mxu0 0
  %135 = vmatprep.mubr.bf16.mxu0 0
  %136 = vmatmul.mubr.bf16.gmra.mxu0 %v31
  %v137 = vpop.f32.mrf.mxu0
  %v138 = vadd.f32 %v53, %v137
  %v139 = vpop.f32.mrf.mxu0
  %v140 = vpop.f32.mrf.mxu0
  %v141 = vpop.f32.mrf.mxu0
  %142 = vdwg.mxu0
  %v143 = vmax.f32 %v138, 0.0
  %v144 = vpack.c.bf16 %v143, %v143
  %v145 = vld [vmem:[%s4] sm:$0xf]
  %v146 = vld [vmem:[%s4 + $0x4] sm:$0xf]
  %v147 = vld [vmem:[%s4 + $0x8] sm:$0xf]
  %v148 = vld [vmem:[%s4 + $0xc] sm:$0xf]
  %v149 = vld [vmem:[%s4 + $0x10] sm:$0xf]
  %v150 = vld [vmem:[%s4 + $0x14] sm:$0xf]
  %v151 = vld [vmem:[%s4 + $0x18] sm:$0xf]
  %v152 = vld [vmem:[%s4 + $0x1c] sm:$0xf]
  %v153 = vld [vmem:[%s4 + $0x20] sm:$0xf]
  %v154 = vld [vmem:[%s4 + $0x24] sm:$0xf]
  %v155 = vld [vmem:[%s4 + $0x28] sm:$0xf]
  %v156 = vld [vmem:[%s4 + $0x2c] sm:$0xf]
  %v157 = vld [vmem:[%s4 + $0x30] sm:$0xf]
  %v158 = vld [vmem:[%s4 + $0x34] sm:$0xf]
  %v159 = vld [vmem:[%s4 + $0x38] sm:$0xf]
  %v160 = vld [vmem:[%s4 + $0x3c] sm:$0xf]
  %v161 = vld [vmem:[%s5] sm:$0x1]
  %v163 = vlaneseq
  %v164 = vshrl.u32 %v163, 7
  %v165 = vsub.s32 0, %v164
  %v166 = vrot.slane %v161, %v165
  %v184 = vunpack.c.l.b16 %v145
  %v185 = vunpack.c.l.b16 %v146
  %v186 = vunpack.c.l.b16 %v147
  %v187 = vunpack.c.l.b16 %v148
  %v188 = vunpack.c.l.b16 %v149
  %v189 = vunpack.c.l.b16 %v150
  %v190 = vunpack.c.l.b16 %v151
  %v191 = vunpack.c.l.b16 %v152
  %v192 = vunpack.c.l.b16 %v153
  %v193 = vunpack.c.l.b16 %v154
  %v194 = vunpack.c.l.b16 %v155
  %v195 = vunpack.c.l.b16 %v156
  %v196 = vunpack.c.l.b16 %v157
  %v197 = vunpack.c.l.b16 %v158
  %v198 = vunpack.c.l.b16 %v159
  %v199 = vunpack.c.l.b16 %v160
  %v200 = vpack.c.b16 %v185, %v184
  %v201 = vpack.c.b16 %v187, %v186
  %v202 = vpack.c.b16 %v189, %v188
  %v203 = vpack.c.b16 %v191, %v190
  %v204 = vpack.c.b16 %v193, %v192
  %v205 = vpack.c.b16 %v195, %v194
  %v206 = vpack.c.b16 %v197, %v196
  %v207 = vpack.c.b16 %v199, %v198
  %216 = vmatprep.subr.bf16.mxu0 0
  %217 = vmatpush1.bf16.msra.mxu0 %v207
  %218 = vmatprep.subr.bf16.mxu0 0
  %219 = vmatpush1.bf16.msra.mxu0 %v206
  %220 = vmatprep.subr.bf16.mxu0 0
  %221 = vmatpush1.bf16.msra.mxu0 %v205
  %222 = vmatprep.subr.bf16.mxu0 0
  %223 = vmatpush1.bf16.msra.mxu0 %v204
  %224 = vmatprep.subr.bf16.mxu0 0
  %225 = vmatpush1.bf16.msra.mxu0 %v203
  %226 = vmatprep.subr.bf16.mxu0 0
  %227 = vmatpush1.bf16.msra.mxu0 %v202
  %228 = vmatprep.subr.bf16.mxu0 0
  %229 = vmatpush1.bf16.msra.mxu0 %v201
  %230 = vmatprep.subr.bf16.mxu0 0
  %231 = vmatpush1.bf16.msra.mxu0 %v200
  %232 = vmatprep.subr.bf16.mxu0 0
  %233 = vmatpush2.bf16.msra.mxu0 0
  %234 = vmatprep.subr.bf16.mxu0 0
  %235 = vmatpush2.bf16.msra.mxu0 0
  %236 = vmatprep.subr.bf16.mxu0 0
  %237 = vmatpush2.bf16.msra.mxu0 0
  %238 = vmatprep.subr.bf16.mxu0 0
  %239 = vmatpush2.bf16.msra.mxu0 0
  %240 = vmatprep.subr.bf16.mxu0 0
  %241 = vmatpush2.bf16.msra.mxu0 0
  %242 = vmatprep.subr.bf16.mxu0 0
  %243 = vmatpush2.bf16.msra.mxu0 0
  %244 = vmatprep.subr.bf16.mxu0 0
  %245 = vmatpush2.bf16.msra.mxu0 0
  %246 = vmatprep.subr.bf16.mxu0 0
  %247 = vmatpush2.bf16.msra.mxu0 0
  %248 = vmatprep.mubr.bf16.mxu0 0
  %249 = vmatmul.mubr.bf16.gmra.mxu0 %v144
  %v250 = vpop.f32.mrf.mxu0
  %v251 = vadd.f32 %v166, %v250
  %v252 = vpop.f32.mrf.mxu0
  %v253 = vpop.f32.mrf.mxu0
  %v254 = vpop.f32.mrf.mxu0
  %255 = vdwg.mxu0
  %v256 = vmax.f32 %v251, 0.0
  %v257 = vpack.c.bf16 %v256, %v256
  %s258 = scalar_lea.vmem %s4, 64
  %v259 = vld [vmem:[%s258] sm:$0xf]
  %v260 = vld [vmem:[%s258 + $0x4] sm:$0xf]
  %v261 = vld [vmem:[%s258 + $0x8] sm:$0xf]
  %v262 = vld [vmem:[%s258 + $0xc] sm:$0xf]
  %v263 = vld [vmem:[%s258 + $0x10] sm:$0xf]
  %v264 = vld [vmem:[%s258 + $0x14] sm:$0xf]
  %v265 = vld [vmem:[%s258 + $0x18] sm:$0xf]
  %v266 = vld [vmem:[%s258 + $0x1c] sm:$0xf]
  %v267 = vld [vmem:[%s258 + $0x20] sm:$0xf]
  %v268 = vld [vmem:[%s258 + $0x24] sm:$0xf]
  %v269 = vld [vmem:[%s258 + $0x28] sm:$0xf]
  %v270 = vld [vmem:[%s258 + $0x2c] sm:$0xf]
  %v271 = vld [vmem:[%s258 + $0x30] sm:$0xf]
  %v272 = vld [vmem:[%s258 + $0x34] sm:$0xf]
  %v273 = vld [vmem:[%s258 + $0x38] sm:$0xf]
  %v274 = vld [vmem:[%s258 + $0x3c] sm:$0xf]
  %s275 = scalar_lea.vmem %s5, 1
  %v276 = vld [vmem:[%s275] sm:$0x1]
  %v278 = vlaneseq
  %v279 = vshrl.u32 %v278, 7
  %v280 = vsub.s32 0, %v279
  %v281 = vrot.slane %v276, %v280
  %v299 = vunpack.c.l.b16 %v259
  %v300 = vunpack.c.l.b16 %v260
  %v301 = vunpack.c.l.b16 %v261
  %v302 = vunpack.c.l.b16 %v262
  %v303 = vunpack.c.l.b16 %v263
  %v304 = vunpack.c.l.b16 %v264
  %v305 = vunpack.c.l.b16 %v265
  %v306 = vunpack.c.l.b16 %v266
  %v307 = vunpack.c.l.b16 %v267
  %v308 = vunpack.c.l.b16 %v268
  %v309 = vunpack.c.l.b16 %v269
  %v310 = vunpack.c.l.b16 %v270
  %v311 = vunpack.c.l.b16 %v271
  %v312 = vunpack.c.l.b16 %v272
  %v313 = vunpack.c.l.b16 %v273
  %v314 = vunpack.c.l.b16 %v274
  %v315 = vpack.c.b16 %v300, %v299
  %v316 = vpack.c.b16 %v302, %v301
  %v317 = vpack.c.b16 %v304, %v303
  %v318 = vpack.c.b16 %v306, %v305
  %v319 = vpack.c.b16 %v308, %v307
  %v320 = vpack.c.b16 %v310, %v309
  %v321 = vpack.c.b16 %v312, %v311
  %v322 = vpack.c.b16 %v314, %v313
  %331 = vmatprep.subr.bf16.mxu0 0
  %332 = vmatpush1.bf16.msra.mxu0 %v322
  %333 = vmatprep.subr.bf16.mxu0 0
  %334 = vmatpush1.bf16.msra.mxu0 %v321
  %335 = vmatprep.subr.bf16.mxu0 0
  %336 = vmatpush1.bf16.msra.mxu0 %v320
  %337 = vmatprep.subr.bf16.mxu0 0
  %338 = vmatpush1.bf16.msra.mxu0 %v319
  %339 = vmatprep.subr.bf16.mxu0 0
  %340 = vmatpush1.bf16.msra.mxu0 %v318
  %341 = vmatprep.subr.bf16.mxu0 0
  %342 = vmatpush1.bf16.msra.mxu0 %v317
  %343 = vmatprep.subr.bf16.mxu0 0
  %344 = vmatpush1.bf16.msra.mxu0 %v316
  %345 = vmatprep.subr.bf16.mxu0 0
  %346 = vmatpush1.bf16.msra.mxu0 %v315
  %347 = vmatprep.subr.bf16.mxu0 0
  %348 = vmatpush2.bf16.msra.mxu0 0
  %349 = vmatprep.subr.bf16.mxu0 0
  %350 = vmatpush2.bf16.msra.mxu0 0
  %351 = vmatprep.subr.bf16.mxu0 0
  %352 = vmatpush2.bf16.msra.mxu0 0
  %353 = vmatprep.subr.bf16.mxu0 0
  %354 = vmatpush2.bf16.msra.mxu0 0
  %355 = vmatprep.subr.bf16.mxu0 0
  %356 = vmatpush2.bf16.msra.mxu0 0
  %357 = vmatprep.subr.bf16.mxu0 0
  %358 = vmatpush2.bf16.msra.mxu0 0
  %359 = vmatprep.subr.bf16.mxu0 0
  %360 = vmatpush2.bf16.msra.mxu0 0
  %361 = vmatprep.subr.bf16.mxu0 0
  %362 = vmatpush2.bf16.msra.mxu0 0
  %363 = vmatprep.mubr.bf16.mxu0 0
  %364 = vmatmul.mubr.bf16.gmra.mxu0 %v257
  %v365 = vpop.f32.mrf.mxu0
  %v366 = vadd.f32 %v281, %v365
  %v367 = vpop.f32.mrf.mxu0
  %v368 = vpop.f32.mrf.mxu0
  %v369 = vpop.f32.mrf.mxu0
  %370 = vdwg.mxu0
  %v371 = vmax.f32 %v366, 0.0
  %v372 = vpack.c.bf16 %v371, %v371
  %v373 = vld [vmem:[%s6] sm:$0xf]
  %v374 = vld [vmem:[%s6 + $0x4] sm:$0xf]
  %v375 = vld [vmem:[%s6 + $0x8] sm:$0xf]
  %v376 = vld [vmem:[%s6 + $0xc] sm:$0xf]
  %v377 = vld [vmem:[%s6 + $0x10] sm:$0xf]
  %v378 = vld [vmem:[%s6 + $0x14] sm:$0xf]
  %v379 = vld [vmem:[%s6 + $0x18] sm:$0xf]
  %v380 = vld [vmem:[%s6 + $0x1c] sm:$0xf]
  %v381 = vld [vmem:[%s6 + $0x20] sm:$0xf]
  %v382 = vld [vmem:[%s6 + $0x24] sm:$0xf]
  %v383 = vld [vmem:[%s6 + $0x28] sm:$0xf]
  %v384 = vld [vmem:[%s6 + $0x2c] sm:$0xf]
  %v385 = vld [vmem:[%s6 + $0x30] sm:$0xf]
  %v386 = vld [vmem:[%s6 + $0x34] sm:$0xf]
  %v387 = vld [vmem:[%s6 + $0x38] sm:$0xf]
  %v388 = vld [vmem:[%s6 + $0x3c] sm:$0xf]
  %v389 = vld [vmem:[%s7] sm:$0x1]
  %v391 = vlaneseq
  %v392 = vshrl.u32 %v391, 7
  %v393 = vsub.s32 0, %v392
  %v394 = vrot.slane %v389, %v393
  %v412 = vunpack.c.l.b16 %v373
  %v413 = vunpack.c.l.b16 %v374
  %v414 = vunpack.c.l.b16 %v375
  %v415 = vunpack.c.l.b16 %v376
  %v416 = vunpack.c.l.b16 %v377
  %v417 = vunpack.c.l.b16 %v378
  %v418 = vunpack.c.l.b16 %v379
  %v419 = vunpack.c.l.b16 %v380
  %v420 = vunpack.c.l.b16 %v381
  %v421 = vunpack.c.l.b16 %v382
  %v422 = vunpack.c.l.b16 %v383
  %v423 = vunpack.c.l.b16 %v384
  %v424 = vunpack.c.l.b16 %v385
  %v425 = vunpack.c.l.b16 %v386
  %v426 = vunpack.c.l.b16 %v387
  %v427 = vunpack.c.l.b16 %v388
  %v428 = vpack.c.b16 %v413, %v412
  %v429 = vpack.c.b16 %v415, %v414
  %v430 = vpack.c.b16 %v417, %v416
  %v431 = vpack.c.b16 %v419, %v418
  %v432 = vpack.c.b16 %v421, %v420
  %v433 = vpack.c.b16 %v423, %v422
  %v434 = vpack.c.b16 %v425, %v424
  %v435 = vpack.c.b16 %v427, %v426
  %444 = vmatprep.subr.bf16.mxu0 0
  %445 = vmatpush1.bf16.msra.mxu0 %v435
  %446 = vmatprep.subr.bf16.mxu0 0
  %447 = vmatpush1.bf16.msra.mxu0 %v434
  %448 = vmatprep.subr.bf16.mxu0 0
  %449 = vmatpush1.bf16.msra.mxu0 %v433
  %450 = vmatprep.subr.bf16.mxu0 0
  %451 = vmatpush1.bf16.msra.mxu0 %v432
  %452 = vmatprep.subr.bf16.mxu0 0
  %453 = vmatpush1.bf16.msra.mxu0 %v431
  %454 = vmatprep.subr.bf16.mxu0 0
  %455 = vmatpush1.bf16.msra.mxu0 %v430
  %456 = vmatprep.subr.bf16.mxu0 0
  %457 = vmatpush1.bf16.msra.mxu0 %v429
  %458 = vmatprep.subr.bf16.mxu0 0
  %459 = vmatpush1.bf16.msra.mxu0 %v428
  %460 = vmatprep.subr.bf16.mxu0 0
  %461 = vmatpush2.bf16.msra.mxu0 0
  %462 = vmatprep.subr.bf16.mxu0 0
  %463 = vmatpush2.bf16.msra.mxu0 0
  %464 = vmatprep.subr.bf16.mxu0 0
  %465 = vmatpush2.bf16.msra.mxu0 0
  %466 = vmatprep.subr.bf16.mxu0 0
  %467 = vmatpush2.bf16.msra.mxu0 0
  %468 = vmatprep.subr.bf16.mxu0 0
  %469 = vmatpush2.bf16.msra.mxu0 0
  %470 = vmatprep.subr.bf16.mxu0 0
  %471 = vmatpush2.bf16.msra.mxu0 0
  %472 = vmatprep.subr.bf16.mxu0 0
  %473 = vmatpush2.bf16.msra.mxu0 0
  %474 = vmatprep.subr.bf16.mxu0 0
  %475 = vmatpush2.bf16.msra.mxu0 0
  %476 = vmatprep.mubr.bf16.mxu0 0
  %477 = vmatmul.mubr.bf16.gmra.mxu0 %v372
  %v478 = vpop.f32.mrf.mxu0
  %v479 = vadd.f32 %v394, %v478
  %v480 = vpop.f32.mrf.mxu0
  %v481 = vpop.f32.mrf.mxu0
  %v482 = vpop.f32.mrf.mxu0
  %483 = vdwg.mxu0
  %v484 = vld [vmem:[%s0] sm:$0x3]
  %v485 = vadd.f32 %v484, %v479
  %486 = vst [vmem:[%s8] sm:$0x3] %v485
  // Predicated region
  $region34: #{_coupling_forward_impl.1} parent=0 // pred_check
    _
  $region35: #{_coupling_forward_impl.1} parent=0 // pred_check_branch
    %488 = sbr.rel (0) target = $region37
  $region36: #{_coupling_forward_impl.1} parent=0 // pred_region
    _
  $region37: #{_coupling_forward_impl.1} parent=0 // pred_fallthru
    _
  // Predicated region
  $region38: #{_coupling_forward_impl.1} parent=0 // pred_check
    _
  $region39: #{_coupling_forward_impl.1} parent=0 // pred_check_branch
    %490 = sbr.rel (0) target = $region41
  $region40: #{_coupling_forward_impl.1} parent=0 // pred_region
    _
  $region41: #{_coupling_forward_impl.1} parent=0 // pred_fallthru
    _

// kernel: _coupling_forward_impl.1
$region0: #{_coupling_forward_impl.1}
  #allocation0 [shape = 'u32[]', space=smem, size = 0x4, offset = 0x4, fixed_abs, tag = 'smem constant byte address 0x4 - core index']
  #allocation1 [shape = 'u32[144,128]{1,0:T(1,128)}', space=vmem, size = 0x12000, scoped, tag = 'internal scratch']
  %s0 = inlined_call_operand.vmem [shape: f32[2,128], index: 0, kind: input, shape index: {}]
  %s1 = inlined_call_operand.vmem [shape: f32[2,128], index: 1, kind: input, shape index: {}]
  %s2 = inlined_call_operand.vmem [shape: bf16[128,128], index: 2, kind: input, shape index: {}]
  %s3 = inlined_call_operand.vmem [shape: f32[1,128], index: 3, kind: input, shape index: {}]
  %s4 = inlined_call_operand.vmem [shape: bf16[2,128,128], index: 4, kind: input, shape index: {}]
  %s5 = inlined_call_operand.vmem [shape: f32[2,1,128], index: 5, kind: input, shape index: {}]
  %s6 = inlined_call_operand.vmem [shape: bf16[128,128], index: 6, kind: input, shape index: {}]
  %s7 = inlined_call_operand.vmem [shape: f32[1,128], index: 7, kind: input, shape index: {}]
  %s8 = inlined_call_operand.vmem [shape: f32[2,128], index: 8, kind: output, shape index: {}]
  %s9 = sld [smem:[#allocation0]]
  $region42: #{_coupling_forward_impl.1} parent=0
    _
  %s11 = ssub.s32 1, %s9
  %s12 = scalar_select 0, %s11, %s9
  // Predicated region
  $region2: #{_coupling_forward_impl.1} parent=0 // pred_check
    _
  $region3: #{_coupling_forward_impl.1} parent=0 // pred_check_branch
    %14 = sbr.rel (0) target = $region5
  $region4: #{_coupling_forward_impl.1} parent=0 // pred_region
    _
  $region5: #{_coupling_forward_impl.1} parent=0 // pred_fallthru
    _
  // Predicated region
  $region6: #{_coupling_forward_impl.1} parent=0 // pred_check
    _
  $region7: #{_coupling_forward_impl.1} parent=0 // pred_check_branch
    %16 = sbr.rel (0) target = $region9
  $region8: #{_coupling_forward_impl.1} parent=0 // pred_region
    _
  $region9: #{_coupling_forward_impl.1} parent=0 // pred_fallthru
    _
  // Predicated region
  $region10: #{_coupling_forward_impl.1} parent=0 // pred_check
    _
  $region11: #{_coupling_forward_impl.1} parent=0 // pred_check_branch
    %18 = sbr.rel (0) target = $region13
  $region12: #{_coupling_forward_impl.1} parent=0 // pred_region
    _
  $region13: #{_coupling_forward_impl.1} parent=0 // pred_fallthru
    _
  // Predicated region
  $region14: #{_coupling_forward_impl.1} parent=0 // pred_check
    _
  $region15: #{_coupling_forward_impl.1} parent=0 // pred_check_branch
    %20 = sbr.rel (0) target = $region17
  $region16: #{_coupling_forward_impl.1} parent=0 // pred_region
    _
  $region17: #{_coupling_forward_impl.1} parent=0 // pred_fallthru
    _
  // Predicated region
  $region18: #{_coupling_forward_impl.1} parent=0 // pred_check
    _
  $region19: #{_coupling_forward_impl.1} parent=0 // pred_check_branch
    %22 = sbr.rel (0) target = $region21
  $region20: #{_coupling_forward_impl.1} parent=0 // pred_region
    _
  $region21: #{_coupling_forward_impl.1} parent=0 // pred_fallthru
    _
  // Predicated region
  $region22: #{_coupling_forward_impl.1} parent=0 // pred_check
    _
  $region23: #{_coupling_forward_impl.1} parent=0 // pred_check_branch
    %24 = sbr.rel (0) target = $region25
  $region24: #{_coupling_forward_impl.1} parent=0 // pred_region
    _
  $region25: #{_coupling_forward_impl.1} parent=0 // pred_fallthru
    _
  // Predicated region
  $region26: #{_coupling_forward_impl.1} parent=0 // pred_check
    _
  $region27: #{_coupling_forward_impl.1} parent=0 // pred_check_branch
    %26 = sbr.rel (0) target = $region29
  $region28: #{_coupling_forward_impl.1} parent=0 // pred_region
    _
  $region29: #{_coupling_forward_impl.1} parent=0 // pred_fallthru
    _
  // Predicated region
  $region30: #{_coupling_forward_impl.1} parent=0 // pred_check
    _
  $region31: #{_coupling_forward_impl.1} parent=0 // pred_check_branch
    %28 = sbr.rel (0) target = $region33
  $region32: #{_coupling_forward_impl.1} parent=0 // pred_region
    _
  $region33: #{_coupling_forward_impl.1} parent=0 // pred_fallthru
    _
  %v30 = vld [vmem:[%s1] sm:$0x3]
  %v31 = vpack.c.bf16 %v30, %v30
  %v32 = vld [vmem:[%s2] sm:$0xf]
  %v33 = vld [vmem:[%s2 + $0x4] sm:$0xf]
  %v34 = vld [vmem:[%s2 + $0x8] sm:$0xf]
  %v35 = vld [vmem:[%s2 + $0xc] sm:$0xf]
  %v36 = vld [vmem:[%s2 + $0x10] sm:$0xf]
  %v37 = vld [vmem:[%s2 + $0x14] sm:$0xf]
  %v38 = vld [vmem:[%s2 + $0x18] sm:$0xf]
  %v39 = vld [vmem:[%s2 + $0x1c] sm:$0xf]
  %v40 = vld [vmem:[%s2 + $0x20] sm:$0xf]
  %v41 = vld [vmem:[%s2 + $0x24] sm:$0xf]
  %v42 = vld [vmem:[%s2 + $0x28] sm:$0xf]
  %v43 = vld [vmem:[%s2 + $0x2c] sm:$0xf]
  %v44 = vld [vmem:[%s2 + $0x30] sm:$0xf]
  %v45 = vld [vmem:[%s2 + $0x34] sm:$0xf]
  %v46 = vld [vmem:[%s2 + $0x38] sm:$0xf]
  %v47 = vld [vmem:[%s2 + $0x3c] sm:$0xf]
  %v48 = vld [vmem:[%s3] sm:$0x1]
  %v50 = vlaneseq
  %v51 = vshrl.u32 %v50, 7
  %v52 = vsub.s32 0, %v51
  %v53 = vrot.slane %v48, %v52
  %v71 = vunpack.c.l.b16 %v32
  %v72 = vunpack.c.l.b16 %v33
  %v73 = vunpack.c.l.b16 %v34
  %v74 = vunpack.c.l.b16 %v35
  %v75 = vunpack.c.l.b16 %v36
  %v76 = vunpack.c.l.b16 %v37
  %v77 = vunpack.c.l.b16 %v38
  %v78 = vunpack.c.l.b16 %v39
  %v79 = vunpack.c.l.b16 %v40
  %v80 = vunpack.c.l.b16 %v41
  %v81 = vunpack.c.l.b16 %v42
  %v82 = vunpack.c.l.b16 %v43
  %v83 = vunpack.c.l.b16 %v44
  %v84 = vunpack.c.l.b16 %v45
  %v85 = vunpack.c.l.b16 %v46
  %v86 = vunpack.c.l.b16 %v47
  %v87 = vpack.c.b16 %v72, %v71
  %v88 = vpack.c.b16 %v74, %v73
  %v89 = vpack.c.b16 %v76, %v75
  %v90 = vpack.c.b16 %v78, %v77
  %v91 = vpack.c.b16 %v80, %v79
  %v92 = vpack.c.b16 %v82, %v81
  %v93 = vpack.c.b16 %v84, %v83
  %v94 = vpack.c.b16 %v86, %v85
  %103 = vmatprep.subr.bf16.mxu0 0
  %104 = vmatpush1.bf16.msra.mxu0 %v94
  %105 = vmatprep.subr.bf16.mxu0 0
  %106 = vmatpush1.bf16.msra.mxu0 %v93
  %107 = vmatprep.subr.bf16.mxu0 0
  %108 = vmatpush1.bf16.msra.mxu0 %v92
  %109 = vmatprep.subr.bf16.mxu0 0
  %110 = vmatpush1.bf16.msra.mxu0 %v91
  %111 = vmatprep.subr.bf16.mxu0 0
  %112 = vmatpush1.bf16.msra.mxu0 %v90
  %113 = vmatprep.subr.bf16.mxu0 0
  %114 = vmatpush1.bf16.msra.mxu0 %v89
  %115 = vmatprep.subr.bf16.mxu0 0
  %116 = vmatpush1.bf16.msra.mxu0 %v88
  %117 = vmatprep.subr.bf16.mxu0 0
  %118 = vmatpush1.bf16.msra.mxu0 %v87
  %119 = vmatprep.subr.bf16.mxu0 0
  %120 = vmatpush2.bf16.msra.mxu0 0
  %121 = vmatprep.subr.bf16.mxu0 0
  %122 = vmatpush2.bf16.msra.mxu0 0
  %123 = vmatprep.subr.bf16.mxu0 0
  %124 = vmatpush2.bf16.msra.mxu0 0
  %125 = vmatprep.subr.bf16.mxu0 0
  %126 = vmatpush2.bf16.msra.mxu0 0
  %127 = vmatprep.subr.bf16.mxu0 0
  %128 = vmatpush2.bf16.msra.mxu0 0
  %129 = vmatprep.subr.bf16.mxu0 0
  %130 = vmatpush2.bf16.msra.mxu0 0
  %131 = vmatprep.subr.bf16.mxu0 0
  %132 = vmatpush2.bf16.msra.mxu0 0
  %133 = vmatprep.subr.bf16.mxu0 0
  %134 = vmatpush2.bf16.msra.mxu0 0
  %135 = vmatprep.mubr.bf16.mxu0 0
  %136 = vmatmul.mubr.bf16.gmra.mxu0 %v31
  %v137 = vpop.f32.mrf.mxu0
  %v138 = vadd.f32 %v53, %v137
  %v139 = vpop.f32.mrf.mxu0
  %v140 = vpop.f32.mrf.mxu0
  %v141 = vpop.f32.mrf.mxu0
  %142 = vdwg.mxu0
  %v143 = vmax.f32 %v138, 0.0
  %v144 = vpack.c.bf16 %v143, %v143
  %v145 = vld [vmem:[%s4] sm:$0xf]
  %v146 = vld [vmem:[%s4 + $0x4] sm:$0xf]
  %v147 = vld [vmem:[%s4 + $0x8] sm:$0xf]
  %v148 = vld [vmem:[%s4 + $0xc] sm:$0xf]
  %v149 = vld [vmem:[%s4 + $0x10] sm:$0xf]
  %v150 = vld [vmem:[%s4 + $0x14] sm:$0xf]
  %v151 = vld [vmem:[%s4 + $0x18] sm:$0xf]
  %v152 = vld [vmem:[%s4 + $0x1c] sm:$0xf]
  %v153 = vld [vmem:[%s4 + $0x20] sm:$0xf]
  %v154 = vld [vmem:[%s4 + $0x24] sm:$0xf]
  %v155 = vld [vmem:[%s4 + $0x28] sm:$0xf]
  %v156 = vld [vmem:[%s4 + $0x2c] sm:$0xf]
  %v157 = vld [vmem:[%s4 + $0x30] sm:$0xf]
  %v158 = vld [vmem:[%s4 + $0x34] sm:$0xf]
  %v159 = vld [vmem:[%s4 + $0x38] sm:$0xf]
  %v160 = vld [vmem:[%s4 + $0x3c] sm:$0xf]
  %v161 = vld [vmem:[%s5] sm:$0x1]
  %v163 = vlaneseq
  %v164 = vshrl.u32 %v163, 7
  %v165 = vsub.s32 0, %v164
  %v166 = vrot.slane %v161, %v165
  %v184 = vunpack.c.l.b16 %v145
  %v185 = vunpack.c.l.b16 %v146
  %v186 = vunpack.c.l.b16 %v147
  %v187 = vunpack.c.l.b16 %v148
  %v188 = vunpack.c.l.b16 %v149
  %v189 = vunpack.c.l.b16 %v150
  %v190 = vunpack.c.l.b16 %v151
  %v191 = vunpack.c.l.b16 %v152
  %v192 = vunpack.c.l.b16 %v153
  %v193 = vunpack.c.l.b16 %v154
  %v194 = vunpack.c.l.b16 %v155
  %v195 = vunpack.c.l.b16 %v156
  %v196 = vunpack.c.l.b16 %v157
  %v197 = vunpack.c.l.b16 %v158
  %v198 = vunpack.c.l.b16 %v159
  %v199 = vunpack.c.l.b16 %v160
  %v200 = vpack.c.b16 %v185, %v184
  %v201 = vpack.c.b16 %v187, %v186
  %v202 = vpack.c.b16 %v189, %v188
  %v203 = vpack.c.b16 %v191, %v190
  %v204 = vpack.c.b16 %v193, %v192
  %v205 = vpack.c.b16 %v195, %v194
  %v206 = vpack.c.b16 %v197, %v196
  %v207 = vpack.c.b16 %v199, %v198
  %216 = vmatprep.subr.bf16.mxu0 0
  %217 = vmatpush1.bf16.msra.mxu0 %v207
  %218 = vmatprep.subr.bf16.mxu0 0
  %219 = vmatpush1.bf16.msra.mxu0 %v206
  %220 = vmatprep.subr.bf16.mxu0 0
  %221 = vmatpush1.bf16.msra.mxu0 %v205
  %222 = vmatprep.subr.bf16.mxu0 0
  %223 = vmatpush1.bf16.msra.mxu0 %v204
  %224 = vmatprep.subr.bf16.mxu0 0
  %225 = vmatpush1.bf16.msra.mxu0 %v203
  %226 = vmatprep.subr.bf16.mxu0 0
  %227 = vmatpush1.bf16.msra.mxu0 %v202
  %228 = vmatprep.subr.bf16.mxu0 0
  %229 = vmatpush1.bf16.msra.mxu0 %v201
  %230 = vmatprep.subr.bf16.mxu0 0
  %231 = vmatpush1.bf16.msra.mxu0 %v200
  %232 = vmatprep.subr.bf16.mxu0 0
  %233 = vmatpush2.bf16.msra.mxu0 0
  %234 = vmatprep.subr.bf16.mxu0 0
  %235 = vmatpush2.bf16.msra.mxu0 0
  %236 = vmatprep.subr.bf16.mxu0 0
  %237 = vmatpush2.bf16.msra.mxu0 0
  %238 = vmatprep.subr.bf16.mxu0 0
  %239 = vmatpush2.bf16.msra.mxu0 0
  %240 = vmatprep.subr.bf16.mxu0 0
  %241 = vmatpush2.bf16.msra.mxu0 0
  %242 = vmatprep.subr.bf16.mxu0 0
  %243 = vmatpush2.bf16.msra.mxu0 0
  %244 = vmatprep.subr.bf16.mxu0 0
  %245 = vmatpush2.bf16.msra.mxu0 0
  %246 = vmatprep.subr.bf16.mxu0 0
  %247 = vmatpush2.bf16.msra.mxu0 0
  %248 = vmatprep.mubr.bf16.mxu0 0
  %249 = vmatmul.mubr.bf16.gmra.mxu0 %v144
  %v250 = vpop.f32.mrf.mxu0
  %v251 = vadd.f32 %v166, %v250
  %v252 = vpop.f32.mrf.mxu0
  %v253 = vpop.f32.mrf.mxu0
  %v254 = vpop.f32.mrf.mxu0
  %255 = vdwg.mxu0
  %v256 = vmax.f32 %v251, 0.0
  %v257 = vpack.c.bf16 %v256, %v256
  %s258 = scalar_lea.vmem %s4, 64
  %v259 = vld [vmem:[%s258] sm:$0xf]
  %v260 = vld [vmem:[%s258 + $0x4] sm:$0xf]
  %v261 = vld [vmem:[%s258 + $0x8] sm:$0xf]
  %v262 = vld [vmem:[%s258 + $0xc] sm:$0xf]
  %v263 = vld [vmem:[%s258 + $0x10] sm:$0xf]
  %v264 = vld [vmem:[%s258 + $0x14] sm:$0xf]
  %v265 = vld [vmem:[%s258 + $0x18] sm:$0xf]
  %v266 = vld [vmem:[%s258 + $0x1c] sm:$0xf]
  %v267 = vld [vmem:[%s258 + $0x20] sm:$0xf]
  %v268 = vld [vmem:[%s258 + $0x24] sm:$0xf]
  %v269 = vld [vmem:[%s258 + $0x28] sm:$0xf]
  %v270 = vld [vmem:[%s258 + $0x2c] sm:$0xf]
  %v271 = vld [vmem:[%s258 + $0x30] sm:$0xf]
  %v272 = vld [vmem:[%s258 + $0x34] sm:$0xf]
  %v273 = vld [vmem:[%s258 + $0x38] sm:$0xf]
  %v274 = vld [vmem:[%s258 + $0x3c] sm:$0xf]
  %s275 = scalar_lea.vmem %s5, 1
  %v276 = vld [vmem:[%s275] sm:$0x1]
  %v278 = vlaneseq
  %v279 = vshrl.u32 %v278, 7
  %v280 = vsub.s32 0, %v279
  %v281 = vrot.slane %v276, %v280
  %v299 = vunpack.c.l.b16 %v259
  %v300 = vunpack.c.l.b16 %v260
  %v301 = vunpack.c.l.b16 %v261
  %v302 = vunpack.c.l.b16 %v262
  %v303 = vunpack.c.l.b16 %v263
  %v304 = vunpack.c.l.b16 %v264
  %v305 = vunpack.c.l.b16 %v265
  %v306 = vunpack.c.l.b16 %v266
  %v307 = vunpack.c.l.b16 %v267
  %v308 = vunpack.c.l.b16 %v268
  %v309 = vunpack.c.l.b16 %v269
  %v310 = vunpack.c.l.b16 %v270
  %v311 = vunpack.c.l.b16 %v271
  %v312 = vunpack.c.l.b16 %v272
  %v313 = vunpack.c.l.b16 %v273
  %v314 = vunpack.c.l.b16 %v274
  %v315 = vpack.c.b16 %v300, %v299
  %v316 = vpack.c.b16 %v302, %v301
  %v317 = vpack.c.b16 %v304, %v303
  %v318 = vpack.c.b16 %v306, %v305
  %v319 = vpack.c.b16 %v308, %v307
  %v320 = vpack.c.b16 %v310, %v309
  %v321 = vpack.c.b16 %v312, %v311
  %v322 = vpack.c.b16 %v314, %v313
  %331 = vmatprep.subr.bf16.mxu0 0
  %332 = vmatpush1.bf16.msra.mxu0 %v322
  %333 = vmatprep.subr.bf16.mxu0 0
  %334 = vmatpush1.bf16.msra.mxu0 %v321
  %335 = vmatprep.subr.bf16.mxu0 0
  %336 = vmatpush1.bf16.msra.mxu0 %v320
  %337 = vmatprep.subr.bf16.mxu0 0
  %338 = vmatpush1.bf16.msra.mxu0 %v319
  %339 = vmatprep.subr.bf16.mxu0 0
  %340 = vmatpush1.bf16.msra.mxu0 %v318
  %341 = vmatprep.subr.bf16.mxu0 0
  %342 = vmatpush1.bf16.msra.mxu0 %v317
  %343 = vmatprep.subr.bf16.mxu0 0
  %344 = vmatpush1.bf16.msra.mxu0 %v316
  %345 = vmatprep.subr.bf16.mxu0 0
  %346 = vmatpush1.bf16.msra.mxu0 %v315
  %347 = vmatprep.subr.bf16.mxu0 0
  %348 = vmatpush2.bf16.msra.mxu0 0
  %349 = vmatprep.subr.bf16.mxu0 0
  %350 = vmatpush2.bf16.msra.mxu0 0
  %351 = vmatprep.subr.bf16.mxu0 0
  %352 = vmatpush2.bf16.msra.mxu0 0
  %353 = vmatprep.subr.bf16.mxu0 0
  %354 = vmatpush2.bf16.msra.mxu0 0
  %355 = vmatprep.subr.bf16.mxu0 0
  %356 = vmatpush2.bf16.msra.mxu0 0
  %357 = vmatprep.subr.bf16.mxu0 0
  %358 = vmatpush2.bf16.msra.mxu0 0
  %359 = vmatprep.subr.bf16.mxu0 0
  %360 = vmatpush2.bf16.msra.mxu0 0
  %361 = vmatprep.subr.bf16.mxu0 0
  %362 = vmatpush2.bf16.msra.mxu0 0
  %363 = vmatprep.mubr.bf16.mxu0 0
  %364 = vmatmul.mubr.bf16.gmra.mxu0 %v257
  %v365 = vpop.f32.mrf.mxu0
  %v366 = vadd.f32 %v281, %v365
  %v367 = vpop.f32.mrf.mxu0
  %v368 = vpop.f32.mrf.mxu0
  %v369 = vpop.f32.mrf.mxu0
  %370 = vdwg.mxu0
  %v371 = vmax.f32 %v366, 0.0
  %v372 = vpack.c.bf16 %v371, %v371
  %v373 = vld [vmem:[%s6] sm:$0xf]
  %v374 = vld [vmem:[%s6 + $0x4] sm:$0xf]
  %v375 = vld [vmem:[%s6 + $0x8] sm:$0xf]
  %v376 = vld [vmem:[%s6 + $0xc] sm:$0xf]
  %v377 = vld [vmem:[%s6 + $0x10] sm:$0xf]
  %v378 = vld [vmem:[%s6 + $0x14] sm:$0xf]
  %v379 = vld [vmem:[%s6 + $0x18] sm:$0xf]
  %v380 = vld [vmem:[%s6 + $0x1c] sm:$0xf]
  %v381 = vld [vmem:[%s6 + $0x20] sm:$0xf]
  %v382 = vld [vmem:[%s6 + $0x24] sm:$0xf]
  %v383 = vld [vmem:[%s6 + $0x28] sm:$0xf]
  %v384 = vld [vmem:[%s6 + $0x2c] sm:$0xf]
  %v385 = vld [vmem:[%s6 + $0x30] sm:$0xf]
  %v386 = vld [vmem:[%s6 + $0x34] sm:$0xf]
  %v387 = vld [vmem:[%s6 + $0x38] sm:$0xf]
  %v388 = vld [vmem:[%s6 + $0x3c] sm:$0xf]
  %v389 = vld [vmem:[%s7] sm:$0x1]
  %v391 = vlaneseq
  %v392 = vshrl.u32 %v391, 7
  %v393 = vsub.s32 0, %v392
  %v394 = vrot.slane %v389, %v393
  %v412 = vunpack.c.l.b16 %v373
  %v413 = vunpack.c.l.b16 %v374
  %v414 = vunpack.c.l.b16 %v375
  %v415 = vunpack.c.l.b16 %v376
  %v416 = vunpack.c.l.b16 %v377
  %v417 = vunpack.c.l.b16 %v378
  %v418 = vunpack.c.l.b16 %v379
  %v419 = vunpack.c.l.b16 %v380
  %v420 = vunpack.c.l.b16 %v381
  %v421 = vunpack.c.l.b16 %v382
  %v422 = vunpack.c.l.b16 %v383
  %v423 = vunpack.c.l.b16 %v384
  %v424 = vunpack.c.l.b16 %v385
  %v425 = vunpack.c.l.b16 %v386
  %v426 = vunpack.c.l.b16 %v387
  %v427 = vunpack.c.l.b16 %v388
  %v428 = vpack.c.b16 %v413, %v412
  %v429 = vpack.c.b16 %v415, %v414
  %v430 = vpack.c.b16 %v417, %v416
  %v431 = vpack.c.b16 %v419, %v418
  %v432 = vpack.c.b16 %v421, %v420
  %v433 = vpack.c.b16 %v423, %v422
  %v434 = vpack.c.b16 %v425, %v424
  %v435 = vpack.c.b16 %v427, %v426
  %444 = vmatprep.subr.bf16.mxu0 0
  %445 = vmatpush1.bf16.msra.mxu0 %v435
  %446 = vmatprep.subr.bf16.mxu0 0
  %447 = vmatpush1.bf16.msra.mxu0 %v434
  %448 = vmatprep.subr.bf16.mxu0 0
  %449 = vmatpush1.bf16.msra.mxu0 %v433
  %450 = vmatprep.subr.bf16.mxu0 0
  %451 = vmatpush1.bf16.msra.mxu0 %v432
  %452 = vmatprep.subr.bf16.mxu0 0
  %453 = vmatpush1.bf16.msra.mxu0 %v431
  %454 = vmatprep.subr.bf16.mxu0 0
  %455 = vmatpush1.bf16.msra.mxu0 %v430
  %456 = vmatprep.subr.bf16.mxu0 0
  %457 = vmatpush1.bf16.msra.mxu0 %v429
  %458 = vmatprep.subr.bf16.mxu0 0
  %459 = vmatpush1.bf16.msra.mxu0 %v428
  %460 = vmatprep.subr.bf16.mxu0 0
  %461 = vmatpush2.bf16.msra.mxu0 0
  %462 = vmatprep.subr.bf16.mxu0 0
  %463 = vmatpush2.bf16.msra.mxu0 0
  %464 = vmatprep.subr.bf16.mxu0 0
  %465 = vmatpush2.bf16.msra.mxu0 0
  %466 = vmatprep.subr.bf16.mxu0 0
  %467 = vmatpush2.bf16.msra.mxu0 0
  %468 = vmatprep.subr.bf16.mxu0 0
  %469 = vmatpush2.bf16.msra.mxu0 0
  %470 = vmatprep.subr.bf16.mxu0 0
  %471 = vmatpush2.bf16.msra.mxu0 0
  %472 = vmatprep.subr.bf16.mxu0 0
  %473 = vmatpush2.bf16.msra.mxu0 0
  %474 = vmatprep.subr.bf16.mxu0 0
  %475 = vmatpush2.bf16.msra.mxu0 0
  %476 = vmatprep.mubr.bf16.mxu0 0
  %477 = vmatmul.mubr.bf16.gmra.mxu0 %v372
  %v478 = vpop.f32.mrf.mxu0
  %v479 = vadd.f32 %v394, %v478
  %v480 = vpop.f32.mrf.mxu0
  %v481 = vpop.f32.mrf.mxu0
  %v482 = vpop.f32.mrf.mxu0
  %483 = vdwg.mxu0
  %v484 = vld [vmem:[%s0] sm:$0x3]
  %v485 = vadd.f32 %v484, %v479
  %486 = vst [vmem:[%s8] sm:$0x3] %v485
  // Predicated region
  $region34: #{_coupling_forward_impl.1} parent=0 // pred_check
    _
  $region35: #{_coupling_forward_impl.1} parent=0 // pred_check_branch
    %488 = sbr.rel (0) target = $region37
  $region36: #{_coupling_forward_impl.1} parent=0 // pred_region
    _
  $region37: #{_coupling_forward_impl.1} parent=0 // pred_fallthru
    _
  // Predicated region
  $region38: #{_coupling_forward_impl.1} parent=0 // pred_check
    _
  $region39: #{_coupling_forward_impl.1} parent=0 // pred_check_branch
    %490 = sbr.rel (0) target = $region41
  $region40: #{_coupling_forward_impl.1} parent=0 // pred_region
    _
  $region41: #{_coupling_forward_impl.1} parent=0 // pred_fallthru
    _

</llo_original>
